<compile_context>
chip_gen: v5e
topology: v5e:2x2
jax: 0.10.0
libtpu: 0.0.40
codegen_flags: <defaults>
</compile_context>

<pallas_src>
import jax
import jax.numpy as jnp
from jax.experimental import pallas as pl
from jax.experimental.pallas import tpu as pltpu


def _round_up(x, m):
    return (x + m - 1) // m * m


def _disc_kernel(h_ref, fpl_ref, fmi_ref, zoff_ref, wfz_ref, wb_ref, out_ref):
    f32 = jnp.float32

    # Bilinear left factor: hw = h @ Wb   (tn, n_h), f32 accumulation on the MXU.
    hw = jnp.dot(h_ref[...], wb_ref[...], preferred_element_type=f32)

    # Per-batch offset (s path + all folded biases), broadcast over rows.
    zoff = zoff_ref[0:1, :].astype(f32)                                   # (1, n_h)

    # Two independent dots sharing the same weight tile (no row-concat copy).
    z1 = jnp.dot(fpl_ref[...], wfz_ref[...], preferred_element_type=f32) + zoff
    z2 = jnp.dot(fmi_ref[...], wfz_ref[...], preferred_element_type=f32) + zoff

    # Bilinear score: rowsum(hw * z_k)  (bilinear bias added in the wrapper).
    sc1 = jnp.sum(hw * z1, axis=-1, keepdims=True)                        # (tn, 1)
    sc2 = jnp.sum(hw * z2, axis=-1, keepdims=True)                        # (tn, 1)

    # Lane-dense output: two 1-row stores into the (2, row_tile) block.
    out_ref[0:1, :] = sc1.T.astype(out_ref.dtype)
    out_ref[1:2, :] = sc2.T.astype(out_ref.dtype)


def discriminator_j_forward(params, s, h, f_pl, f_mi,
                            s_bias1=None, s_bias2=None,
                            row_tile=1024, use_bf16=False):
    """Forward pass of Discriminator_J. Returns logits of shape (B, 2N)."""
    B, N, n_h = h.shape
    n_f = f_pl.shape[-1]
    assert row_tile % 128 == 0, "row_tile must be a multiple of 128 (output lane width)"

    f32 = jnp.float32
    in_dtype = jnp.bfloat16 if use_bf16 else f32

    # Adaptive row tile: never inflate small graphs beyond one 128-aligned tile.
    row_tile = max(128, min(row_tile, _round_up(N, 128)))
    n_pad = _round_up(N, row_tile)
    nt = n_pad // row_tile
    r_pad = B * n_pad

    # ---- Weight / bias preparation (tiny, done once in plain JAX) -------------
    wf_t = params["w_f_w"].astype(f32).T                 # (n_f, n_h)
    ws_t = params["w_s_w"].astype(f32).T                 # (n_h, n_h)
    wz1_t = params["w_z_w"][:, :n_h].astype(f32).T       # (n_h, n_h)  acts on zf
    wz2_t = params["w_z_w"][:, n_h:].astype(f32).T       # (n_h, n_h)  acts on zs
    wb = params["f_k_w"][0].astype(f32)                  # (n_h, n_h)
    bf = params["w_f_b"].astype(f32)
    bs = params["w_s_b"].astype(f32)
    bz = params["w_z_b"].astype(f32)
    bk = params["f_k_b"].astype(f32)[0]

    # Fuse w_f with the zf-half of w_z (no nonlinearity in between).
    wfz = (wf_t @ wz1_t).astype(in_dtype)                # (n_f, n_h)
    wb_k = wb.astype(in_dtype)                           # (n_h, n_h)
    # Batch-only offset: s path + all biases except the final bilinear bias.
    zoff = (s.astype(f32) @ ws_t + bs) @ wz2_t + bz + bf @ wz1_t          # (B, n_h)
    # Small 8-sublane replication so the per-batch block is (8, n_h) aligned.
    zoff8 = jnp.broadcast_to(zoff[:, None, :], (B, 8, n_h)).reshape(B * 8, n_h)

    # ---- Activations: cast first, pad only the row axis (no lane padding) -----
    def prep(x):
        x = x.astype(in_dtype)
        if n_pad != N:
            x = jnp.pad(x, ((0, 0), (0, n_pad - N), (0, 0)))
        return x.reshape(B * n_pad, x.shape[-1])

    h2 = prep(h)                                          # (R_pad, n_h)
    fp2 = prep(f_pl)                                      # (R_pad, n_f)
    fm2 = prep(f_mi)                                      # (R_pad, n_f)

    # ---- Pallas call ----------------------------------------------------------
    row_idx = lambda b, j: (b * nt + j, 0)
    itemsize = jnp.dtype(in_dtype).itemsize
    bytes_accessed = (
        (h2.size + fp2.size + fm2.size + wfz.size + wb_k.size) * itemsize
        + zoff8.size * 4 + 2 * r_pad * 4)
    flops = 2 * r_pad * n_h * n_h + 2 * (2 * r_pad) * n_f * n_h + 4 * r_pad * n_h

    out = pl.pallas_call(
        _disc_kernel,
        out_shape=jax.ShapeDtypeStruct((2, r_pad), f32),
        grid_spec=pltpu.PrefetchScalarGridSpec(
            num_scalar_prefetch=0,
            grid=(B, nt),
            in_specs=[
                pl.BlockSpec((row_tile, n_h), row_idx),             # h
                pl.BlockSpec((row_tile, n_f), row_idx),             # f_pl
                pl.BlockSpec((row_tile, n_f), row_idx),             # f_mi
                pl.BlockSpec((8, n_h), lambda b, j: (b, 0)),        # zoff (per batch)
                pl.BlockSpec((n_f, n_h), lambda b, j: (0, 0)),      # Wfz (constant)
                pl.BlockSpec((n_h, n_h), lambda b, j: (0, 0)),      # Wb  (constant)
            ],
            out_specs=pl.BlockSpec((2, row_tile), lambda b, j: (0, b * nt + j)),
        ),
        compiler_params=pltpu.CompilerParams(
            dimension_semantics=("parallel", "parallel")),
        cost_estimate=pl.CostEstimate(
            flops=flops, transcendentals=0, bytes_accessed=bytes_accessed),
    )(h2, fp2, fm2, zoff8, wfz, wb_k)

    # ---- Un-pad / finalize ----------------------------------------------------
    sc = out.reshape(2, B, n_pad)[:, :, :N] + bk          # (2, B, N)
    sc_1, sc_2 = sc[0], sc[1]
    if s_bias1 is not None:
        sc_1 = sc_1 + s_bias1
    if s_bias2 is not None:
        sc_2 = sc_2 + s_bias2
    return jnp.concatenate([sc_1, sc_2], axis=1)          # (B, 2N)


def _reference_forward(params, s, h, f_pl, f_mi):
    """Pure-JAX reference mirroring the PyTorch forward."""
    B, N, n_h = h.shape
    s_x = jnp.broadcast_to(s[:, None, :], (B, N, n_h))
    zf_1 = f_pl @ params["w_f_w"].T + params["w_f_b"]
    zf_2 = f_mi @ params["w_f_w"].T + params["w_f_b"]
    zs = s_x @ params["w_s_w"].T + params["w_s_b"]
    z_1 = jnp.concatenate([zf_1, zs], -1) @ params["w_z_w"].T + params["w_z_b"]
    z_2 = jnp.concatenate([zf_2, zs], -1) @ params["w_z_w"].T + params["w_z_b"]
    wb = params["f_k_w"][0]
    sc_1 = jnp.einsum("bni,ij,bnj->bn", h, wb, z_1) + params["f_k_b"][0]
    sc_2 = jnp.einsum("bni,ij,bnj->bn", h, wb, z_2) + params["f_k_b"][0]
    return jnp.concatenate([sc_1, sc_2], axis=1)


def _xavier_uniform(key, shape, fan_in, fan_out):
    bound = (6.0 / (fan_in + fan_out)) ** 0.5
    return jax.random.uniform(key, shape, jnp.float32, -bound, bound)


def init_params(key, n_h, n_f):
    k1, k2, k3, k4 = jax.random.split(key, 4)
    return {
        # nn.Bilinear(n_h, n_h, 1): weight (1, n_h, n_h), bias (1,)
        "f_k_w": _xavier_uniform(k1, (1, n_h, n_h), n_h * n_h, n_h),
        "f_k_b": jnp.zeros((1,), jnp.float32),
        # nn.Linear(n_f, n_h): weight (n_h, n_f)
        "w_f_w": _xavier_uniform(k2, (n_h, n_f), n_f, n_h),
        "w_f_b": jnp.zeros((n_h,), jnp.float32),
        # nn.Linear(n_h, n_h)
        "w_s_w": _xavier_uniform(k3, (n_h, n_h), n_h, n_h),
        "w_s_b": jnp.zeros((n_h,), jnp.float32),
        # nn.Linear(2*n_h, n_h)
        "w_z_w": _xavier_uniform(k4, (n_h, 2 * n_h), 2 * n_h, n_h),
        "w_z_b": jnp.zeros((n_h,), jnp.float32),
    }


if __name__ == "__main__":
    key = jax.random.PRNGKey(0)

    # --- small primary check (shapes implied by the module) --------------------
    B, N, n_h, n_f = 2, 8, 32, 16
    kp, ks, kh, kfp, kfm, k2 = jax.random.split(key, 6)
    params = init_params(kp, n_h, n_f)

    s = jax.random.normal(ks, (B, n_h), jnp.float32)
    h = jax.random.normal(kh, (B, N, n_h), jnp.float32)
    f_pl = jax.random.normal(kfp, (B, N, n_f), jnp.float32)
    f_mi = jax.random.normal(kfm, (B, N, n_f), jnp.float32)

    logits = discriminator_j_forward(params, s, h, f_pl, f_mi)
    logits = jax.block_until_ready(logits)

    ref = _reference_forward(params, s, h, f_pl, f_mi)
    assert logits.shape == (B, 2 * N), logits.shape
    assert jnp.allclose(logits, ref, atol=1e-3, rtol=1e-3), (
        "mismatch vs reference:\n%s\n%s" % (logits, ref))

    # --- secondary check: multi-tile grid + row padding path --------------------
    N2 = 300
    kh2, kfp2, kfm2 = jax.random.split(k2, 3)
    h_b = jax.random.normal(kh2, (B, N2, n_h), jnp.float32)
    fp_b = jax.random.normal(kfp2, (B, N2, n_f), jnp.float32)
    fm_b = jax.random.normal(kfm2, (B, N2, n_f), jnp.float32)
    logits_b = discriminator_j_forward(params, s, h_b, fp_b, fm_b, row_tile=128)
    logits_b = jax.block_until_ready(logits_b)
    ref_b = _reference_forward(params, s, h_b, fp_b, fm_b)
    assert logits_b.shape == (B, 2 * N2), logits_b.shape
    assert jnp.allclose(logits_b, ref_b, atol=1e-3, rtol=1e-3), "multi-tile mismatch"

    print("KERNEL_OK")
</pallas_src>

<mosaic_0001>
module attributes {stable_mosaic.version = 11 : i64} {
  func.func @_disc_kernel(%arg0: i32, %arg1: i32, %arg2: memref<128x32xf32, #tpu.memory_space<vmem>>, %arg3: memref<128x16xf32, #tpu.memory_space<vmem>>, %arg4: memref<128x16xf32, #tpu.memory_space<vmem>>, %arg5: memref<8x32xf32, #tpu.memory_space<vmem>>, %arg6: memref<16x32xf32, #tpu.memory_space<vmem>>, %arg7: memref<32x32xf32, #tpu.memory_space<vmem>>, %arg8: memref<2x128xf32, #tpu.memory_space<vmem>>) attributes {dimension_semantics = [#tpu.dimension_semantics<parallel>, #tpu.dimension_semantics<parallel>], iteration_bounds = array<i64: 2, 1>, scalar_prefetch = 0 : i64, scratch_operands = 0 : i64, tpu.core_type = #tpu.core_type<tc>, window_params = [{transform_indices = @transform_0, window_bounds = array<i64: 128, 32>}, {transform_indices = @transform_1, window_bounds = array<i64: 128, 16>}, {transform_indices = @transform_2, window_bounds = array<i64: 128, 16>}, {transform_indices = @transform_3, window_bounds = array<i64: 8, 32>}, {pipeline_mode = #tpu.pipeline_mode<synchronous>, transform_indices = @transform_4, window_bounds = array<i64: 16, 32>}, {pipeline_mode = #tpu.pipeline_mode<synchronous>, transform_indices = @transform_5, window_bounds = array<i64: 32, 32>}, {transform_indices = @transform_6, window_bounds = array<i64: 2, 128>}]} {
    %c0 = arith.constant 0 : index
    %c0_0 = arith.constant 0 : index
    %0 = vector.load %arg2[%c0, %c0_0] : memref<128x32xf32, #tpu.memory_space<vmem>>, vector<128x32xf32>
    %c0_1 = arith.constant 0 : index
    %c0_2 = arith.constant 0 : index
    %1 = vector.load %arg7[%c0_1, %c0_2] : memref<32x32xf32, #tpu.memory_space<vmem>>, vector<32x32xf32>
    %cst = arith.constant dense<0.000000e+00> : vector<128x32xf32>
    %2 = tpu.matmul %0, %1, %cst {dimension_numbers = #tpu.dot_dimension_numbers<[1], [0], [0], [1], [0, 0, 1, 1], [], []>} : vector<128x32xf32>, vector<32x32xf32>, vector<128x32xf32> -> vector<128x32xf32>
    %c0_3 = arith.constant 0 : index
    %c0_4 = arith.constant 0 : index
    %3 = vector.load %arg5[%c0_3, %c0_4] : memref<8x32xf32, #tpu.memory_space<vmem>>, vector<1x32xf32>
    %c0_5 = arith.constant 0 : index
    %c0_6 = arith.constant 0 : index
    %4 = vector.load %arg3[%c0_5, %c0_6] : memref<128x16xf32, #tpu.memory_space<vmem>>, vector<128x16xf32>
    %c0_7 = arith.constant 0 : index
    %c0_8 = arith.constant 0 : index
    %5 = vector.load %arg6[%c0_7, %c0_8] : memref<16x32xf32, #tpu.memory_space<vmem>>, vector<16x32xf32>
    %cst_9 = arith.constant dense<0.000000e+00> : vector<128x32xf32>
    %6 = tpu.matmul %4, %5, %cst_9 {dimension_numbers = #tpu.dot_dimension_numbers<[1], [0], [0], [1], [0, 0, 1, 1], [], []>} : vector<128x16xf32>, vector<16x32xf32>, vector<128x32xf32> -> vector<128x32xf32>
    %7 = vector.broadcast %3 : vector<1x32xf32> to vector<128x32xf32>
    %8 = arith.addf %6, %7 : vector<128x32xf32>
    %c0_10 = arith.constant 0 : index
    %c0_11 = arith.constant 0 : index
    %9 = vector.load %arg4[%c0_10, %c0_11] : memref<128x16xf32, #tpu.memory_space<vmem>>, vector<128x16xf32>
    %c0_12 = arith.constant 0 : index
    %c0_13 = arith.constant 0 : index
    %10 = vector.load %arg6[%c0_12, %c0_13] : memref<16x32xf32, #tpu.memory_space<vmem>>, vector<16x32xf32>
    %cst_14 = arith.constant dense<0.000000e+00> : vector<128x32xf32>
    %11 = tpu.matmul %9, %10, %cst_14 {dimension_numbers = #tpu.dot_dimension_numbers<[1], [0], [0], [1], [0, 0, 1, 1], [], []>} : vector<128x16xf32>, vector<16x32xf32>, vector<128x32xf32> -> vector<128x32xf32>
    %12 = vector.broadcast %3 : vector<1x32xf32> to vector<128x32xf32>
    %13 = arith.addf %11, %12 : vector<128x32xf32>
    %14 = arith.mulf %2, %8 : vector<128x32xf32>
    %cst_15 = arith.constant dense<0.000000e+00> : vector<128xf32>
    %15 = vector.multi_reduction <add>, %14, %cst_15 [1] : vector<128x32xf32> to vector<128xf32>
    %16 = vector.shape_cast %15 : vector<128xf32> to vector<128x1xf32>
    %17 = arith.mulf %2, %13 : vector<128x32xf32>
    %cst_16 = arith.constant dense<0.000000e+00> : vector<128xf32>
    %18 = vector.multi_reduction <add>, %17, %cst_16 [1] : vector<128x32xf32> to vector<128xf32>
    %19 = vector.shape_cast %18 : vector<128xf32> to vector<128x1xf32>
    %20 = tpu.transpose %16, [1, 0] : vector<128x1xf32> -> vector<1x128xf32>
    %c0_17 = arith.constant 0 : index
    %c0_18 = arith.constant 0 : index
    %21 = vector.load %arg8[%c0_17, %c0_18] : memref<2x128xf32, #tpu.memory_space<vmem>>, vector<1x128xf32>
    tpu.vector_store %arg8[%c0_17, %c0_18], %20 {strides = array<i32>} : memref<2x128xf32, #tpu.memory_space<vmem>>, vector<1x128xf32>,
    %22 = tpu.transpose %19, [1, 0] : vector<128x1xf32> -> vector<1x128xf32>
    %c1 = arith.constant 1 : index
    %c0_19 = arith.constant 0 : index
    %23 = vector.load %arg8[%c1, %c0_19] : memref<2x128xf32, #tpu.memory_space<vmem>>, vector<1x128xf32>
    tpu.vector_store %arg8[%c1, %c0_19], %22 {strides = array<i32>} : memref<2x128xf32, #tpu.memory_space<vmem>>, vector<1x128xf32>,
    return
  }
  func.func @transform_0(%arg0: i32, %arg1: i32) -> (i32, i32) {
    %c1_i32 = arith.constant 1 : i32
    %0 = arith.muli %arg0, %c1_i32 : i32
    %1 = arith.addi %0, %arg1 : i32
    %c0_i32 = arith.constant 0 : i32
    %c0_i32_0 = arith.constant 0 : i32
    return %1, %c0_i32 : i32, i32
  }
  func.func @transform_1(%arg0: i32, %arg1: i32) -> (i32, i32) {
    %c1_i32 = arith.constant 1 : i32
    %0 = arith.muli %arg0, %c1_i32 : i32
    %1 = arith.addi %0, %arg1 : i32
    %c0_i32 = arith.constant 0 : i32
    %c0_i32_0 = arith.constant 0 : i32
    return %1, %c0_i32 : i32, i32
  }
  func.func @transform_2(%arg0: i32, %arg1: i32) -> (i32, i32) {
    %c1_i32 = arith.constant 1 : i32
    %0 = arith.muli %arg0, %c1_i32 : i32
    %1 = arith.addi %0, %arg1 : i32
    %c0_i32 = arith.constant 0 : i32
    %c0_i32_0 = arith.constant 0 : i32
    return %1, %c0_i32 : i32, i32
  }
  func.func @transform_3(%arg0: i32, %arg1: i32) -> (i32, i32) {
    %c0_i32 = arith.constant 0 : i32
    %c0_i32_0 = arith.constant 0 : i32
    return %arg0, %c0_i32 : i32, i32
  }
  func.func @transform_4(%arg0: i32, %arg1: i32) -> (i32, i32) {
    %c0_i32 = arith.constant 0 : i32
    %c0_i32_0 = arith.constant 0 : i32
    %c0_i32_1 = arith.constant 0 : i32
    return %c0_i32, %c0_i32_0 : i32, i32
  }
  func.func @transform_5(%arg0: i32, %arg1: i32) -> (i32, i32) {
    %c0_i32 = arith.constant 0 : i32
    %c0_i32_0 = arith.constant 0 : i32
    %c0_i32_1 = arith.constant 0 : i32
    return %c0_i32, %c0_i32_0 : i32, i32
  }
  func.func @transform_6(%arg0: i32, %arg1: i32) -> (i32, i32) {
    %c1_i32 = arith.constant 1 : i32
    %0 = arith.muli %arg0, %c1_i32 : i32
    %1 = arith.addi %0, %arg1 : i32
    %c0_i32 = arith.constant 0 : i32
    %c0_i32_0 = arith.constant 0 : i32
    return %c0_i32, %1 : i32, i32
  }
}

</mosaic_0001>

<llo_original>
// kernel: tpu_custom_call.1
$region0: #{tpu_custom_call.1}
  #allocation0 [shape = 'u32[]', space=smem, size = 0x4, offset = 0x4, fixed_abs, tag = 'smem constant byte address 0x4 - core index']
  #allocation1 [shape = 'u32[72,128]{1,0:T(1,128)}', space=vmem, size = 0x9000, scoped, tag = 'internal scratch']
  %s0 = inlined_call_operand.vmem [shape: f32[256,32], index: 0, kind: input, shape index: {}]
  %s1 = inlined_call_operand.vmem [shape: f32[256,16], index: 1, kind: input, shape index: {}]
  %s2 = inlined_call_operand.vmem [shape: f32[256,16], index: 2, kind: input, shape index: {}]
  %s3 = inlined_call_operand.vmem [shape: f32[16,32], index: 3, kind: input, shape index: {}]
  %s4 = inlined_call_operand.vmem [shape: f32[16,32], index: 4, kind: input, shape index: {}]
  %s5 = inlined_call_operand.vmem [shape: f32[32,32], index: 5, kind: input, shape index: {}]
  %s6 = inlined_call_operand.hbm [shape: f32[2,256], index: 6, kind: output, shape index: {}]
  %s7 = sld [smem:[#allocation0]]
  $region57: #{tpu_custom_call.1} parent=0
    _
  %s9 = ssub.s32 1, %s7
  %s10 = scalar_select 0, %s9, %s7
  $region1: #{tpu_custom_call.1} parent=0
    #allocation2 [shape = 'u8[2048]{0}', space=vmem, size = 0x800, scoped, tag = 'output window, operand 0']
    #allocation3 [shape = 's32[2]{0}', space=sflag, size = 0x8, scoped, tag = 'scoped memory for tpu_custom_call.1']
    %11 = vsyncpa [#allocation3], 0
    %s12 = scalar_lea.sflag [#allocation3], 1
    %13 = vsyncpa %s12, 0
    loop: start=0, step=1, limit=4
    $region2: #{tpu_custom_call.1} parent=1 // loop_pre_header
      _
    $region3: #{tpu_custom_call.1} parent=1 // loop_header
      %s15 = sphi 0, %s19
      %p16 = scmp.ge.s32.totalorder %s15, 4
      %s22 = sphi 0, %s34
      %s23 = sphi 0, %s30
      %s24 = sphi 0, %s22
      %s25 = sphi 0, %s23
      %s26 = sphi 0, %s24
      %s27 = sphi 0, %s25
      %s39 = sphi 0, %s41
      %s42 = sphi 0, %s39
      %s43 = sphi 0, %s42
      %s59 = sphi 0, %s43
      %s67 = sphi 0, %s69
      %s70 = sphi 0, %s67
      %s71 = sphi 0, %s70
      %s87 = sphi 0, %s71
      %s95 = sphi 0, %s97
      %s98 = sphi 0, %s95
      %s99 = sphi 0, %s98
      %s115 = sphi 0, %s99
      %s121 = sphi 0, %s123
      %s124 = sphi 0, %s121
      %s125 = sphi 0, %s124
      %s141 = sphi 0, %s125
      %s145 = sphi 0, %s145
      %s147 = sphi 0, %s145
      %s148 = sphi 0, %s147
      %s162 = sphi 0, %s148
      %s166 = sphi 0, %s166
      %s168 = sphi 0, %s166
      %s169 = sphi 0, %s168
      %s183 = sphi 0, %s169
      %s191 = sphi 0, %s193
      %s194 = sphi 0, %s191
      %s195 = sphi 0, %s194
      %s211 = sphi 0, %s195
    $region4: #{tpu_custom_call.1} parent=1 // loop_header_branch
      %18 = sbr.rel (%p16) target = $region8
    $region5: #{tpu_custom_call.1} parent=1 // loop_body
      %s20 = ssub.s32 %s15, 1
      %s21 = ssub.s32 %s15, 2
      %s28 = sadd.s32 1, %s23
      %p29 = scmp.ge.s32.totalorder %s28, 1
      %s30 = scalar_select %p29, 0, %s28
      %s31 = sadd.s32 1, %s22
      %s32 = scalar_select %p29, %s31, %s22
      %p33 = scmp.ge.s32.totalorder %s32, 2
      %s34 = scalar_select %p33, 0, %s32
      %s35 = sadd.s32 %s22, %s23
      %s36 = sadd.s32 %s34, %s30
      %s37 = ssub.s32 %s35, %s36
      %p38 = scmp.eq.s32.totalorder %s37, 0
      %s40 = sadd.s32 %s39, 1
      %s41 = scalar_select %p38, %s39, %s40
      %p44 = pneg %p38
      %p45 = scmp.eq.s32.totalorder %s15, 1
      %p46 = por %p44, %p45
      %p47 = scmp.ne.s32.totalorder %s39, %s42
      %p48 = scmp.eq.s32.totalorder %s15, 0
      %p49 = por %p47, %p48
      %p50 = scmp.ne.s32.totalorder %s39, %s42
      %p51 = scmp.eq.s32.totalorder %s20, 1
      %p52 = por %p50, %p51
      %p53 = scmp.ne.s32.totalorder %s42, %s43
      %p54 = scmp.eq.s32.totalorder %s20, 0
      %p55 = por %p53, %p54
      %p56 = scmp.ne.s32.totalorder %s42, %s43
      %p57 = scmp.eq.s32.totalorder %s21, 1
      %p58 = por %p56, %p57
      %p60 = scmp.ne.s32.totalorder %s43, %s59
      %p61 = scmp.eq.s32.totalorder %s21, 0
      %p62 = por %p60, %p61
      %s63 = sadd.s32 %s22, %s23
      %s64 = sadd.s32 %s34, %s30
      %s65 = ssub.s32 %s63, %s64
      %p66 = scmp.eq.s32.totalorder %s65, 0
      %s68 = sadd.s32 %s67, 1
      %s69 = scalar_select %p66, %s67, %s68
      %p72 = pneg %p66
      %p73 = scmp.eq.s32.totalorder %s15, 1
      %p74 = por %p72, %p73
      %p75 = scmp.ne.s32.totalorder %s67, %s70
      %p76 = scmp.eq.s32.totalorder %s15, 0
      %p77 = por %p75, %p76
      %p78 = scmp.ne.s32.totalorder %s67, %s70
      %p79 = scmp.eq.s32.totalorder %s20, 1
      %p80 = por %p78, %p79
      %p81 = scmp.ne.s32.totalorder %s70, %s71
      %p82 = scmp.eq.s32.totalorder %s20, 0
      %p83 = por %p81, %p82
      %p84 = scmp.ne.s32.totalorder %s70, %s71
      %p85 = scmp.eq.s32.totalorder %s21, 1
      %p86 = por %p84, %p85
      %p88 = scmp.ne.s32.totalorder %s71, %s87
      %p89 = scmp.eq.s32.totalorder %s21, 0
      %p90 = por %p88, %p89
      %s91 = sadd.s32 %s22, %s23
      %s92 = sadd.s32 %s34, %s30
      %s93 = ssub.s32 %s91, %s92
      %p94 = scmp.eq.s32.totalorder %s93, 0
      %s96 = sadd.s32 %s95, 1
      %s97 = scalar_select %p94, %s95, %s96
      %p100 = pneg %p94
      %p101 = scmp.eq.s32.totalorder %s15, 1
      %p102 = por %p100, %p101
      %p103 = scmp.ne.s32.totalorder %s95, %s98
      %p104 = scmp.eq.s32.totalorder %s15, 0
      %p105 = por %p103, %p104
      %p106 = scmp.ne.s32.totalorder %s95, %s98
      %p107 = scmp.eq.s32.totalorder %s20, 1
      %p108 = por %p106, %p107
      %p109 = scmp.ne.s32.totalorder %s98, %s99
      %p110 = scmp.eq.s32.totalorder %s20, 0
      %p111 = por %p109, %p110
      %p112 = scmp.ne.s32.totalorder %s98, %s99
      %p113 = scmp.eq.s32.totalorder %s21, 1
      %p114 = por %p112, %p113
      %p116 = scmp.ne.s32.totalorder %s99, %s115
      %p117 = scmp.eq.s32.totalorder %s21, 0
      %p118 = por %p116, %p117
      %s119 = ssub.s32 %s22, %s34
      %p120 = scmp.eq.s32.totalorder %s119, 0
      %s122 = sadd.s32 %s121, 1
      %s123 = scalar_select %p120, %s121, %s122
      %p126 = pneg %p120
      %p127 = scmp.eq.s32.totalorder %s15, 1
      %p128 = por %p126, %p127
      %p129 = scmp.ne.s32.totalorder %s121, %s124
      %p130 = scmp.eq.s32.totalorder %s15, 0
      %p131 = por %p129, %p130
      %p132 = scmp.ne.s32.totalorder %s121, %s124
      %p133 = scmp.eq.s32.totalorder %s20, 1
      %p134 = por %p132, %p133
      %p135 = scmp.ne.s32.totalorder %s124, %s125
      %p136 = scmp.eq.s32.totalorder %s20, 0
      %p137 = por %p135, %p136
      %p138 = scmp.ne.s32.totalorder %s124, %s125
      %p139 = scmp.eq.s32.totalorder %s21, 1
      %p140 = por %p138, %p139
      %p142 = scmp.ne.s32.totalorder %s125, %s141
      %p143 = scmp.eq.s32.totalorder %s21, 0
      %p144 = por %p142, %p143
      %s146 = sadd.s32 %s145, 1
      %p149 = scmp.eq.s32.totalorder %s15, 1
      %p150 = scmp.ne.s32.totalorder %s145, %s147
      %p151 = scmp.eq.s32.totalorder %s15, 0
      %p152 = por %p150, %p151
      %p153 = scmp.ne.s32.totalorder %s145, %s147
      %p154 = scmp.eq.s32.totalorder %s20, 1
      %p155 = por %p153, %p154
      %p156 = scmp.ne.s32.totalorder %s147, %s148
      %p157 = scmp.eq.s32.totalorder %s20, 0
      %p158 = por %p156, %p157
      %p159 = scmp.ne.s32.totalorder %s147, %s148
      %p160 = scmp.eq.s32.totalorder %s21, 1
      %p161 = por %p159, %p160
      %p163 = scmp.ne.s32.totalorder %s148, %s162
      %p164 = scmp.eq.s32.totalorder %s21, 0
      %p165 = por %p163, %p164
      %s167 = sadd.s32 %s166, 1
      %p170 = scmp.eq.s32.totalorder %s15, 1
      %p171 = scmp.ne.s32.totalorder %s166, %s168
      %p172 = scmp.eq.s32.totalorder %s15, 0
      %p173 = por %p171, %p172
      %p174 = scmp.ne.s32.totalorder %s166, %s168
      %p175 = scmp.eq.s32.totalorder %s20, 1
      %p176 = por %p174, %p175
      %p177 = scmp.ne.s32.totalorder %s168, %s169
      %p178 = scmp.eq.s32.totalorder %s20, 0
      %p179 = por %p177, %p178
      %p180 = scmp.ne.s32.totalorder %s168, %s169
      %p181 = scmp.eq.s32.totalorder %s21, 1
      %p182 = por %p180, %p181
      %p184 = scmp.ne.s32.totalorder %s169, %s183
      %p185 = scmp.eq.s32.totalorder %s21, 0
      %p186 = por %p184, %p185
      %s187 = sadd.s32 %s22, %s23
      %s188 = sadd.s32 %s34, %s30
      %s189 = ssub.s32 %s187, %s188
      %p190 = scmp.eq.s32.totalorder %s189, 0
      %s192 = sadd.s32 %s191, 1
      %s193 = scalar_select %p190, %s191, %s192
      %p196 = pneg %p190
      %p197 = scmp.eq.s32.totalorder %s15, 1
      %p198 = por %p196, %p197
      %p199 = scmp.ne.s32.totalorder %s191, %s194
      %p200 = scmp.eq.s32.totalorder %s15, 0
      %p201 = por %p199, %p200
      %p202 = scmp.ne.s32.totalorder %s191, %s194
      %p203 = scmp.eq.s32.totalorder %s20, 1
      %p204 = por %p202, %p203
      %p205 = scmp.ne.s32.totalorder %s194, %s195
      %p206 = scmp.eq.s32.totalorder %s20, 0
      %p207 = por %p205, %p206
      %p208 = scmp.ne.s32.totalorder %s194, %s195
      %p209 = scmp.eq.s32.totalorder %s21, 1
      %p210 = por %p208, %p209
      %p212 = scmp.ne.s32.totalorder %s195, %s211
      %p213 = scmp.eq.s32.totalorder %s21, 0
      %p214 = por %p212, %p213
      %p215 = scmp.le.s32.totalorder 1, %s15
      %p216 = scmp.lt.s32.totalorder %s15, 3
      %p217 = pnand %p215, %p216
      %p218 = pneg %p217
      // Predicated region
      $region9: #{tpu_custom_call.1} parent=5 // pred_check
        _
      $region10: #{tpu_custom_call.1} parent=5 // pred_check_branch
        %220 = sbr.rel (%p217) target = $region12
      $region11: #{tpu_custom_call.1} parent=5 // pred_region
        %s221 = ssub.s32 %s15, 1
        // Predicated region
        $region13: #{tpu_custom_call.1} parent=11 // pred_check
          %p222 = pneg %p158
        $region14: #{tpu_custom_call.1} parent=11 // pred_check_branch
          %224 = sbr.rel (%p222) target = $region16
        $region15: #{tpu_custom_call.1} parent=11 // pred_region
          _
        $region16: #{tpu_custom_call.1} parent=11 // pred_fallthru
          _
        // Predicated region
        $region17: #{tpu_custom_call.1} parent=11 // pred_check
          %p225 = pneg %p179
        $region18: #{tpu_custom_call.1} parent=11 // pred_check_branch
          %227 = sbr.rel (%p225) target = $region20
        $region19: #{tpu_custom_call.1} parent=11 // pred_region
          _
        $region20: #{tpu_custom_call.1} parent=11 // pred_fallthru
          _
      $region12: #{tpu_custom_call.1} parent=5 // pred_fallthru
        _
      %p228 = scmp.lt.s32.totalorder %s15, 2
      // Predicated region
      $region21: #{tpu_custom_call.1} parent=5 // pred_check
        %p229 = pneg %p228
      $region22: #{tpu_custom_call.1} parent=5 // pred_check_branch
        %231 = sbr.rel (%p229) target = $region24
      $region23: #{tpu_custom_call.1} parent=5 // pred_region
        // Predicated region
        $region25: #{tpu_custom_call.1} parent=23 // pred_check
          %p232 = pneg %p49
        $region26: #{tpu_custom_call.1} parent=23 // pred_check_branch
          %234 = sbr.rel (%p232) target = $region28
        $region27: #{tpu_custom_call.1} parent=23 // pred_region
          %s235 = sadd.s32 %s22, %s23
          %s236 = smul.u32 16, %s235
          %p237 = scmp.lt.s32.totalorder %s236, 31
          %s238 = scalar_select %p237, %s236, 31
          %s239 = smul.addr %s238, 8
          %s240 = scalar_lea.vmem %s0, %s239
          %s241 = sadd.s32 %s22, %s23
          %s242 = smul.u32 16, %s241
        $region28: #{tpu_custom_call.1} parent=23 // pred_fallthru
          _
        // Predicated region
        $region29: #{tpu_custom_call.1} parent=23 // pred_check
          %p243 = pneg %p77
        $region30: #{tpu_custom_call.1} parent=23 // pred_check_branch
          %245 = sbr.rel (%p243) target = $region32
        $region31: #{tpu_custom_call.1} parent=23 // pred_region
          %s246 = sadd.s32 %s22, %s23
          %s247 = smul.u32 16, %s246
          %p248 = scmp.lt.s32.totalorder %s247, 31
          %s249 = scalar_select %p248, %s247, 31
          %s250 = smul.addr %s249, 8
          %s251 = scalar_lea.vmem %s1, %s250
          %s252 = sadd.s32 %s22, %s23
          %s253 = smul.u32 16, %s252
        $region32: #{tpu_custom_call.1} parent=23 // pred_fallthru
          _
        // Predicated region
        $region33: #{tpu_custom_call.1} parent=23 // pred_check
          %p254 = pneg %p105
        $region34: #{tpu_custom_call.1} parent=23 // pred_check_branch
          %256 = sbr.rel (%p254) target = $region36
        $region35: #{tpu_custom_call.1} parent=23 // pred_region
          %s257 = sadd.s32 %s22, %s23
          %s258 = smul.u32 16, %s257
          %p259 = scmp.lt.s32.totalorder %s258, 31
          %s260 = scalar_select %p259, %s258, 31
          %s261 = smul.addr %s260, 8
          %s262 = scalar_lea.vmem %s2, %s261
          %s263 = sadd.s32 %s22, %s23
          %s264 = smul.u32 16, %s263
        $region36: #{tpu_custom_call.1} parent=23 // pred_fallthru
          _
        // Predicated region
        $region37: #{tpu_custom_call.1} parent=23 // pred_check
          %p265 = pneg %p131
        $region38: #{tpu_custom_call.1} parent=23 // pred_check_branch
          %267 = sbr.rel (%p265) target = $region40
        $region39: #{tpu_custom_call.1} parent=23 // pred_region
          %p268 = scmp.lt.s32.totalorder %s22, 1
          %s269 = scalar_select %p268, %s22, 1
          %s270 = smul.addr %s269, 8
          %s271 = scalar_lea.vmem %s3, %s270
        $region40: #{tpu_custom_call.1} parent=23 // pred_fallthru
          _
      $region24: #{tpu_custom_call.1} parent=5 // pred_fallthru
        _
      %p272 = scmp.le.s32.totalorder 1, %s15
      %p273 = scmp.lt.s32.totalorder %s15, 3
      %p274 = pnand %p272, %p273
      %p275 = pneg %p274
      // Predicated region
      $region41: #{tpu_custom_call.1} parent=5 // pred_check
        _
      $region42: #{tpu_custom_call.1} parent=5 // pred_check_branch
        %277 = sbr.rel (%p274) target = $region44
      $region43: #{tpu_custom_call.1} parent=5 // pred_region
        %s278 = ssub.s32 %s15, 1
        %s279 = sadd.s32 %s24, %s25
        %s280 = smul.u32 16, %s279
        %p281 = scmp.lt.s32.totalorder %s280, 31
        %s282 = scalar_select %p281, %s280, 31
        %s283 = smul.addr %s282, 8
        %s284 = scalar_lea.vmem %s0, %s283
        %p285 = pneg %p55
        %p286 = pneg %p52
        %s287 = sadd.s32 %s24, %s25
        %s288 = smul.u32 16, %s287
        %p289 = scmp.lt.s32.totalorder %s288, 31
        %s290 = scalar_select %p289, %s288, 31
        %s291 = smul.addr %s290, 8
        %s292 = scalar_lea.vmem %s1, %s291
        %p293 = pneg %p83
        %p294 = pneg %p80
        %s295 = sadd.s32 %s24, %s25
        %s296 = smul.u32 16, %s295
        %p297 = scmp.lt.s32.totalorder %s296, 31
        %s298 = scalar_select %p297, %s296, 31
        %s299 = smul.addr %s298, 8
        %s300 = scalar_lea.vmem %s2, %s299
        %p301 = pneg %p111
        %p302 = pneg %p108
        %p303 = scmp.lt.s32.totalorder %s24, 1
        %s304 = scalar_select %p303, %s24, 1
        %s305 = smul.addr %s304, 8
        %s306 = scalar_lea.vmem %s3, %s305
        %p307 = pneg %p137
        %p308 = pneg %p134
        %p309 = pneg %p158
        %p310 = pneg %p155
        %p311 = pneg %p179
        %p312 = pneg %p176
        %p313 = pneg %p207
        %p314 = pneg %p204
        %s315 = sand.u32 %s194, 1
        %s316 = scalar_lea.sflag [#allocation3], %s315
        %s317 = sand.u32 %s194, 1
        %s318 = smul.addr %s317, 2
        %s319 = scalar_lea.vmem [#allocation2], %s318
        %s320 = sadd.s32 %s24, %s25
        %s321 = smul.u32 16, %s320
        %p322 = scmp.lt.s32.totalorder %s321, 31
        %s323 = scalar_select %p322, %s321, 31
        %s324 = smul.addr %s323, 8
        %s325 = scalar_lea.vmem %s0, %s324
        %s326 = sadd.s32 %s24, %s25
        %s327 = smul.u32 16, %s326
        %s328 = sadd.s32 %s24, %s25
        %s329 = smul.u32 16, %s328
        %p330 = scmp.lt.s32.totalorder %s329, 31
        %s331 = scalar_select %p330, %s329, 31
        %s332 = smul.addr %s331, 8
        %s333 = scalar_lea.vmem %s1, %s332
        %s334 = sadd.s32 %s24, %s25
        %s335 = smul.u32 16, %s334
        %s336 = sadd.s32 %s24, %s25
        %s337 = smul.u32 16, %s336
        %p338 = scmp.lt.s32.totalorder %s337, 31
        %s339 = scalar_select %p338, %s337, 31
        %s340 = smul.addr %s339, 8
        %s341 = scalar_lea.vmem %s2, %s340
        %s342 = sadd.s32 %s24, %s25
        %s343 = smul.u32 16, %s342
        %p344 = scmp.lt.s32.totalorder %s24, 1
        %s345 = scalar_select %p344, %s24, 1
        %s346 = smul.addr %s345, 8
        %s347 = scalar_lea.vmem %s3, %s346
        %s348 = sadd.s32 %s24, %s25
        %v349 = vld [vmem:[%s325] sm:$0xff]
        %v350 = vld [vmem:[%s325 + $0x8] sm:$0xff]
        %v351 = vld [vmem:[%s325 + $0x10] sm:$0xff]
        %v352 = vld [vmem:[%s325 + $0x18] sm:$0xff]
        %v353 = vld [vmem:[%s325 + $0x20] sm:$0xff]
        %v354 = vld [vmem:[%s325 + $0x28] sm:$0xff]
        %v355 = vld [vmem:[%s325 + $0x30] sm:$0xff]
        %v356 = vld [vmem:[%s325 + $0x38] sm:$0xff]
        %v357 = vld [vmem:[%s325 + $0x40] sm:$0xff]
        %v358 = vld [vmem:[%s325 + $0x48] sm:$0xff]
        %v359 = vld [vmem:[%s325 + $0x50] sm:$0xff]
        %v360 = vld [vmem:[%s325 + $0x58] sm:$0xff]
        %v361 = vld [vmem:[%s325 + $0x60] sm:$0xff]
        %v362 = vld [vmem:[%s325 + $0x68] sm:$0xff]
        %v363 = vld [vmem:[%s325 + $0x70] sm:$0xff]
        %v364 = vld [vmem:[%s325 + $0x78] sm:$0xff]
        %v365 = vld [vmem:[%s5] sm:$0xff]
        %v366 = vld [vmem:[%s5 + $0x8] sm:$0xff]
        %v367 = vld [vmem:[%s5 + $0x10] sm:$0xff]
        %v368 = vld [vmem:[%s5 + $0x18] sm:$0xff]
        %vm369 = vcmask 261120
        %v371 = vsel %vm369, %v349, 0
        %v374 = vsel %vm369, %v350, 0
        %v377 = vsel %vm369, %v351, 0
        %v380 = vsel %vm369, %v352, 0
        %v383 = vsel %vm369, %v353, 0
        %v386 = vsel %vm369, %v354, 0
        %v389 = vsel %vm369, %v355, 0
        %v392 = vsel %vm369, %v356, 0
        %v395 = vsel %vm369, %v357, 0
        %v398 = vsel %vm369, %v358, 0
        %v401 = vsel %vm369, %v359, 0
        %v404 = vsel %vm369, %v360, 0
        %v407 = vsel %vm369, %v361, 0
        %v410 = vsel %vm369, %v362, 0
        %v413 = vsel %vm369, %v363, 0
        %v416 = vsel %vm369, %v364, 0
        %418 = vmatpush.msra.mxu0 0.0
        %419 = vmatpush.msra.mxu0 0.0
        %420 = vmatpush.msra.mxu0 0.0
        %421 = vmatpush.msra.mxu0 0.0
        %422 = vmatpush.msra.mxu0 0.0
        %423 = vmatpush.msra.mxu0 0.0
        %424 = vmatpush.msra.mxu0 0.0
        %425 = vmatpush.msra.mxu0 0.0
        %426 = vmatpush.msra.mxu0 0.0
        %427 = vmatpush.msra.mxu0 0.0
        %428 = vmatpush.msra.mxu0 0.0
        %429 = vmatpush.msra.mxu0 0.0
        %430 = vmatpush.msra.mxu0 %v368
        %431 = vmatpush.msra.mxu0 %v367
        %432 = vmatpush.msra.mxu0 %v366
        %433 = vmatpush.msra.mxu0 %v365
        %434 = vmatmul.f32.gmra.mxu0 %v371
        %v435 = vpop.f32.mrf.mxu0
        %v436 = vadd.f32 0.0, %v435
        %437 = vmatmul.f32.gmra.mxu0 %v374
        %v438 = vpop.f32.mrf.mxu0
        %v439 = vadd.f32 0.0, %v438
        %440 = vmatmul.f32.gmra.mxu0 %v377
        %v441 = vpop.f32.mrf.mxu0
        %v442 = vadd.f32 0.0, %v441
        %443 = vmatmul.f32.gmra.mxu0 %v380
        %v444 = vpop.f32.mrf.mxu0
        %v445 = vadd.f32 0.0, %v444
        %446 = vmatmul.f32.gmra.mxu0 %v383
        %v447 = vpop.f32.mrf.mxu0
        %v448 = vadd.f32 0.0, %v447
        %449 = vmatmul.f32.gmra.mxu0 %v386
        %v450 = vpop.f32.mrf.mxu0
        %v451 = vadd.f32 0.0, %v450
        %452 = vmatmul.f32.gmra.mxu0 %v389
        %v453 = vpop.f32.mrf.mxu0
        %v454 = vadd.f32 0.0, %v453
        %455 = vmatmul.f32.gmra.mxu0 %v392
        %v456 = vpop.f32.mrf.mxu0
        %v457 = vadd.f32 0.0, %v456
        %458 = vmatmul.f32.gmra.mxu0 %v395
        %v459 = vpop.f32.mrf.mxu0
        %v460 = vadd.f32 0.0, %v459
        %461 = vmatmul.f32.gmra.mxu0 %v398
        %v462 = vpop.f32.mrf.mxu0
        %v463 = vadd.f32 0.0, %v462
        %464 = vmatmul.f32.gmra.mxu0 %v401
        %v465 = vpop.f32.mrf.mxu0
        %v466 = vadd.f32 0.0, %v465
        %467 = vmatmul.f32.gmra.mxu0 %v404
        %v468 = vpop.f32.mrf.mxu0
        %v469 = vadd.f32 0.0, %v468
        %470 = vmatmul.f32.gmra.mxu0 %v407
        %v471 = vpop.f32.mrf.mxu0
        %v472 = vadd.f32 0.0, %v471
        %473 = vmatmul.f32.gmra.mxu0 %v410
        %v474 = vpop.f32.mrf.mxu0
        %v475 = vadd.f32 0.0, %v474
        %476 = vmatmul.f32.gmra.mxu0 %v413
        %v477 = vpop.f32.mrf.mxu0
        %v478 = vadd.f32 0.0, %v477
        %479 = vmatmul.f32.gmra.mxu0 %v416
        %v480 = vpop.f32.mrf.mxu0
        %v481 = vadd.f32 0.0, %v480
        %482 = vdwg.mxu0
        %v483 = vld [vmem:[%s347] sm:$0x1]
        %v484 = vld [vmem:[%s333] sm:$0xff]
        %v485 = vld [vmem:[%s333 + $0x8] sm:$0xff]
        %v486 = vld [vmem:[%s333 + $0x10] sm:$0xff]
        %v487 = vld [vmem:[%s333 + $0x18] sm:$0xff]
        %v488 = vld [vmem:[%s333 + $0x20] sm:$0xff]
        %v489 = vld [vmem:[%s333 + $0x28] sm:$0xff]
        %v490 = vld [vmem:[%s333 + $0x30] sm:$0xff]
        %v491 = vld [vmem:[%s333 + $0x38] sm:$0xff]
        %v492 = vld [vmem:[%s333 + $0x40] sm:$0xff]
        %v493 = vld [vmem:[%s333 + $0x48] sm:$0xff]
        %v494 = vld [vmem:[%s333 + $0x50] sm:$0xff]
        %v495 = vld [vmem:[%s333 + $0x58] sm:$0xff]
        %v496 = vld [vmem:[%s333 + $0x60] sm:$0xff]
        %v497 = vld [vmem:[%s333 + $0x68] sm:$0xff]
        %v498 = vld [vmem:[%s333 + $0x70] sm:$0xff]
        %v499 = vld [vmem:[%s333 + $0x78] sm:$0xff]
        %v500 = vld [vmem:[%s4] sm:$0xff]
        %v501 = vld [vmem:[%s4 + $0x8] sm:$0xff]
        %v502 = vperm.slane %v483, 0
        %vm503 = vcmask 130048
        %v505 = vsel %vm503, %v484, 0
        %v508 = vsel %vm503, %v485, 0
        %v511 = vsel %vm503, %v486, 0
        %v514 = vsel %vm503, %v487, 0
        %v517 = vsel %vm503, %v488, 0
        %v520 = vsel %vm503, %v489, 0
        %v523 = vsel %vm503, %v490, 0
        %v526 = vsel %vm503, %v491, 0
        %v529 = vsel %vm503, %v492, 0
        %v532 = vsel %vm503, %v493, 0
        %v535 = vsel %vm503, %v494, 0
        %v538 = vsel %vm503, %v495, 0
        %v541 = vsel %vm503, %v496, 0
        %v544 = vsel %vm503, %v497, 0
        %v547 = vsel %vm503, %v498, 0
        %v550 = vsel %vm503, %v499, 0
        %552 = vmatpush.msra.mxu0 0.0
        %553 = vmatpush.msra.mxu0 0.0
        %554 = vmatpush.msra.mxu0 0.0
        %555 = vmatpush.msra.mxu0 0.0
        %556 = vmatpush.msra.mxu0 0.0
        %557 = vmatpush.msra.mxu0 0.0
        %558 = vmatpush.msra.mxu0 0.0
        %559 = vmatpush.msra.mxu0 0.0
        %560 = vmatpush.msra.mxu0 0.0
        %561 = vmatpush.msra.mxu0 0.0
        %562 = vmatpush.msra.mxu0 0.0
        %563 = vmatpush.msra.mxu0 0.0
        %564 = vmatpush.msra.mxu0 0.0
        %565 = vmatpush.msra.mxu0 0.0
        %566 = vmatpush.msra.mxu0 %v501
        %567 = vmatpush.msra.mxu0 %v500
        %568 = vmatmul.f32.gmra.mxu0 %v505
        %v569 = vpop.f32.mrf.mxu0
        %v570 = vadd.f32 %v502, %v569
        %571 = vmatmul.f32.gmra.mxu0 %v508
        %v572 = vpop.f32.mrf.mxu0
        %v573 = vadd.f32 %v502, %v572
        %574 = vmatmul.f32.gmra.mxu0 %v511
        %v575 = vpop.f32.mrf.mxu0
        %v576 = vadd.f32 %v502, %v575
        %577 = vmatmul.f32.gmra.mxu0 %v514
        %v578 = vpop.f32.mrf.mxu0
        %v579 = vadd.f32 %v502, %v578
        %580 = vmatmul.f32.gmra.mxu0 %v517
        %v581 = vpop.f32.mrf.mxu0
        %v582 = vadd.f32 %v502, %v581
        %583 = vmatmul.f32.gmra.mxu0 %v520
        %v584 = vpop.f32.mrf.mxu0
        %v585 = vadd.f32 %v502, %v584
        %586 = vmatmul.f32.gmra.mxu0 %v523
        %v587 = vpop.f32.mrf.mxu0
        %v588 = vadd.f32 %v502, %v587
        %589 = vmatmul.f32.gmra.mxu0 %v526
        %v590 = vpop.f32.mrf.mxu0
        %v591 = vadd.f32 %v502, %v590
        %592 = vmatmul.f32.gmra.mxu0 %v529
        %v593 = vpop.f32.mrf.mxu0
        %v594 = vadd.f32 %v502, %v593
        %595 = vmatmul.f32.gmra.mxu0 %v532
        %v596 = vpop.f32.mrf.mxu0
        %v597 = vadd.f32 %v502, %v596
        %598 = vmatmul.f32.gmra.mxu0 %v535
        %v599 = vpop.f32.mrf.mxu0
        %v600 = vadd.f32 %v502, %v599
        %601 = vmatmul.f32.gmra.mxu0 %v538
        %v602 = vpop.f32.mrf.mxu0
        %v603 = vadd.f32 %v502, %v602
        %604 = vmatmul.f32.gmra.mxu0 %v541
        %v605 = vpop.f32.mrf.mxu0
        %v606 = vadd.f32 %v502, %v605
        %607 = vmatmul.f32.gmra.mxu0 %v544
        %v608 = vpop.f32.mrf.mxu0
        %v609 = vadd.f32 %v502, %v608
        %610 = vmatmul.f32.gmra.mxu0 %v547
        %v611 = vpop.f32.mrf.mxu0
        %v612 = vadd.f32 %v502, %v611
        %613 = vmatmul.f32.gmra.mxu0 %v550
        %v614 = vpop.f32.mrf.mxu0
        %v615 = vadd.f32 %v502, %v614
        %616 = vdwg.mxu0
        %v617 = vld [vmem:[%s341] sm:$0xff]
        %v618 = vld [vmem:[%s341 + $0x8] sm:$0xff]
        %v619 = vld [vmem:[%s341 + $0x10] sm:$0xff]
        %v620 = vld [vmem:[%s341 + $0x18] sm:$0xff]
        %v621 = vld [vmem:[%s341 + $0x20] sm:$0xff]
        %v622 = vld [vmem:[%s341 + $0x28] sm:$0xff]
        %v623 = vld [vmem:[%s341 + $0x30] sm:$0xff]
        %v624 = vld [vmem:[%s341 + $0x38] sm:$0xff]
        %v625 = vld [vmem:[%s341 + $0x40] sm:$0xff]
        %v626 = vld [vmem:[%s341 + $0x48] sm:$0xff]
        %v627 = vld [vmem:[%s341 + $0x50] sm:$0xff]
        %v628 = vld [vmem:[%s341 + $0x58] sm:$0xff]
        %v629 = vld [vmem:[%s341 + $0x60] sm:$0xff]
        %v630 = vld [vmem:[%s341 + $0x68] sm:$0xff]
        %v631 = vld [vmem:[%s341 + $0x70] sm:$0xff]
        %v632 = vld [vmem:[%s341 + $0x78] sm:$0xff]
        %v634 = vsel %vm503, %v617, 0
        %v637 = vsel %vm503, %v618, 0
        %v640 = vsel %vm503, %v619, 0
        %v643 = vsel %vm503, %v620, 0
        %v646 = vsel %vm503, %v621, 0
        %v649 = vsel %vm503, %v622, 0
        %v652 = vsel %vm503, %v623, 0
        %v655 = vsel %vm503, %v624, 0
        %v658 = vsel %vm503, %v625, 0
        %v661 = vsel %vm503, %v626, 0
        %v664 = vsel %vm503, %v627, 0
        %v667 = vsel %vm503, %v628, 0
        %v670 = vsel %vm503, %v629, 0
        %v673 = vsel %vm503, %v630, 0
        %v676 = vsel %vm503, %v631, 0
        %v679 = vsel %vm503, %v632, 0
        %681 = vmatpush.msra.mxu0 0.0
        %682 = vmatpush.msra.mxu0 0.0
        %683 = vmatpush.msra.mxu0 0.0
        %684 = vmatpush.msra.mxu0 0.0
        %685 = vmatpush.msra.mxu0 0.0
        %686 = vmatpush.msra.mxu0 0.0
        %687 = vmatpush.msra.mxu0 0.0
        %688 = vmatpush.msra.mxu0 0.0
        %689 = vmatpush.msra.mxu0 0.0
        %690 = vmatpush.msra.mxu0 0.0
        %691 = vmatpush.msra.mxu0 0.0
        %692 = vmatpush.msra.mxu0 0.0
        %693 = vmatpush.msra.mxu0 0.0
        %694 = vmatpush.msra.mxu0 0.0
        %695 = vmatpush.msra.mxu0 %v501
        %696 = vmatpush.msra.mxu0 %v500
        %697 = vmatmul.f32.gmra.mxu0 %v634
        %v698 = vpop.f32.mrf.mxu0
        %v699 = vadd.f32 %v502, %v698
        %700 = vmatmul.f32.gmra.mxu0 %v637
        %v701 = vpop.f32.mrf.mxu0
        %v702 = vadd.f32 %v502, %v701
        %703 = vmatmul.f32.gmra.mxu0 %v640
        %v704 = vpop.f32.mrf.mxu0
        %v705 = vadd.f32 %v502, %v704
        %706 = vmatmul.f32.gmra.mxu0 %v643
        %v707 = vpop.f32.mrf.mxu0
        %v708 = vadd.f32 %v502, %v707
        %709 = vmatmul.f32.gmra.mxu0 %v646
        %v710 = vpop.f32.mrf.mxu0
        %v711 = vadd.f32 %v502, %v710
        %712 = vmatmul.f32.gmra.mxu0 %v649
        %v713 = vpop.f32.mrf.mxu0
        %v714 = vadd.f32 %v502, %v713
        %715 = vmatmul.f32.gmra.mxu0 %v652
        %v716 = vpop.f32.mrf.mxu0
        %v717 = vadd.f32 %v502, %v716
        %718 = vmatmul.f32.gmra.mxu0 %v655
        %v719 = vpop.f32.mrf.mxu0
        %v720 = vadd.f32 %v502, %v719
        %721 = vmatmul.f32.gmra.mxu0 %v658
        %v722 = vpop.f32.mrf.mxu0
        %v723 = vadd.f32 %v502, %v722
        %724 = vmatmul.f32.gmra.mxu0 %v661
        %v725 = vpop.f32.mrf.mxu0
        %v726 = vadd.f32 %v502, %v725
        %727 = vmatmul.f32.gmra.mxu0 %v664
        %v728 = vpop.f32.mrf.mxu0
        %v729 = vadd.f32 %v502, %v728
        %730 = vmatmul.f32.gmra.mxu0 %v667
        %v731 = vpop.f32.mrf.mxu0
        %v732 = vadd.f32 %v502, %v731
        %733 = vmatmul.f32.gmra.mxu0 %v670
        %v734 = vpop.f32.mrf.mxu0
        %v735 = vadd.f32 %v502, %v734
        %736 = vmatmul.f32.gmra.mxu0 %v673
        %v737 = vpop.f32.mrf.mxu0
        %v738 = vadd.f32 %v502, %v737
        %739 = vmatmul.f32.gmra.mxu0 %v676
        %v740 = vpop.f32.mrf.mxu0
        %v741 = vadd.f32 %v502, %v740
        %742 = vmatmul.f32.gmra.mxu0 %v679
        %v743 = vpop.f32.mrf.mxu0
        %v744 = vadd.f32 %v502, %v743
        %745 = vdwg.mxu0
        %v746 = vmul.f32 %v436, %v570
        %v747 = vmul.f32 %v439, %v573
        %v748 = vmul.f32 %v442, %v576
        %v749 = vmul.f32 %v445, %v579
        %v750 = vmul.f32 %v448, %v582
        %v751 = vmul.f32 %v451, %v585
        %v752 = vmul.f32 %v454, %v588
        %v753 = vmul.f32 %v457, %v591
        %v754 = vmul.f32 %v460, %v594
        %v755 = vmul.f32 %v463, %v597
        %v756 = vmul.f32 %v466, %v600
        %v757 = vmul.f32 %v469, %v603
        %v758 = vmul.f32 %v472, %v606
        %v759 = vmul.f32 %v475, %v609
        %v760 = vmul.f32 %v478, %v612
        %v761 = vmul.f32 %v481, %v615
        %v762 = vsel %vm369, %v746, 0.0
        %763 = vadd.xlane.f32.xlu0 %v762
        %v764 = vpop.xlane.xlu0 %763
        %v765 = vsel %vm369, %v747, 0.0
        %766 = vadd.xlane.f32.xlu0 %v765
        %v767 = vpop.xlane.xlu0 %766
        %v768 = vsel %vm369, %v748, 0.0
        %769 = vadd.xlane.f32.xlu0 %v768
        %v770 = vpop.xlane.xlu0 %769
        %v771 = vsel %vm369, %v749, 0.0
        %772 = vadd.xlane.f32.xlu0 %v771
        %v773 = vpop.xlane.xlu0 %772
        %v774 = vsel %vm369, %v750, 0.0
        %775 = vadd.xlane.f32.xlu0 %v774
        %v776 = vpop.xlane.xlu0 %775
        %v777 = vsel %vm369, %v751, 0.0
        %778 = vadd.xlane.f32.xlu0 %v777
        %v779 = vpop.xlane.xlu0 %778
        %v780 = vsel %vm369, %v752, 0.0
        %781 = vadd.xlane.f32.xlu0 %v780
        %v782 = vpop.xlane.xlu0 %781
        %v783 = vsel %vm369, %v753, 0.0
        %784 = vadd.xlane.f32.xlu0 %v783
        %v785 = vpop.xlane.xlu0 %784
        %v786 = vsel %vm369, %v754, 0.0
        %787 = vadd.xlane.f32.xlu0 %v786
        %v788 = vpop.xlane.xlu0 %787
        %v789 = vsel %vm369, %v755, 0.0
        %790 = vadd.xlane.f32.xlu0 %v789
        %v791 = vpop.xlane.xlu0 %790
        %v792 = vsel %vm369, %v756, 0.0
        %793 = vadd.xlane.f32.xlu0 %v792
        %v794 = vpop.xlane.xlu0 %793
        %v795 = vsel %vm369, %v757, 0.0
        %796 = vadd.xlane.f32.xlu0 %v795
        %v797 = vpop.xlane.xlu0 %796
        %v798 = vsel %vm369, %v758, 0.0
        %799 = vadd.xlane.f32.xlu0 %v798
        %v800 = vpop.xlane.xlu0 %799
        %v801 = vsel %vm369, %v759, 0.0
        %802 = vadd.xlane.f32.xlu0 %v801
        %v803 = vpop.xlane.xlu0 %802
        %v804 = vsel %vm369, %v760, 0.0
        %805 = vadd.xlane.f32.xlu0 %v804
        %v806 = vpop.xlane.xlu0 %805
        %v807 = vsel %vm369, %v761, 0.0
        %808 = vadd.xlane.f32.xlu0 %v807
        %v809 = vpop.xlane.xlu0 %808
        %v810 = vmul.f32 %v436, %v699
        %v811 = vmul.f32 %v439, %v702
        %v812 = vmul.f32 %v442, %v705
        %v813 = vmul.f32 %v445, %v708
        %v814 = vmul.f32 %v448, %v711
        %v815 = vmul.f32 %v451, %v714
        %v816 = vmul.f32 %v454, %v717
        %v817 = vmul.f32 %v457, %v720
        %v818 = vmul.f32 %v460, %v723
        %v819 = vmul.f32 %v463, %v726
        %v820 = vmul.f32 %v466, %v729
        %v821 = vmul.f32 %v469, %v732
        %v822 = vmul.f32 %v472, %v735
        %v823 = vmul.f32 %v475, %v738
        %v824 = vmul.f32 %v478, %v741
        %v825 = vmul.f32 %v481, %v744
        %v826 = vsel %vm369, %v810, 0.0
        %827 = vadd.xlane.f32.xlu0 %v826
        %v828 = vpop.xlane.xlu0 %827
        %v829 = vsel %vm369, %v811, 0.0
        %830 = vadd.xlane.f32.xlu0 %v829
        %v831 = vpop.xlane.xlu0 %830
        %v832 = vsel %vm369, %v812, 0.0
        %833 = vadd.xlane.f32.xlu0 %v832
        %v834 = vpop.xlane.xlu0 %833
        %v835 = vsel %vm369, %v813, 0.0
        %836 = vadd.xlane.f32.xlu0 %v835
        %v837 = vpop.xlane.xlu0 %836
        %v838 = vsel %vm369, %v814, 0.0
        %839 = vadd.xlane.f32.xlu0 %v838
        %v840 = vpop.xlane.xlu0 %839
        %v841 = vsel %vm369, %v815, 0.0
        %842 = vadd.xlane.f32.xlu0 %v841
        %v843 = vpop.xlane.xlu0 %842
        %v844 = vsel %vm369, %v816, 0.0
        %845 = vadd.xlane.f32.xlu0 %v844
        %v846 = vpop.xlane.xlu0 %845
        %v847 = vsel %vm369, %v817, 0.0
        %848 = vadd.xlane.f32.xlu0 %v847
        %v849 = vpop.xlane.xlu0 %848
        %v850 = vsel %vm369, %v818, 0.0
        %851 = vadd.xlane.f32.xlu0 %v850
        %v852 = vpop.xlane.xlu0 %851
        %v853 = vsel %vm369, %v819, 0.0
        %854 = vadd.xlane.f32.xlu0 %v853
        %v855 = vpop.xlane.xlu0 %854
        %v856 = vsel %vm369, %v820, 0.0
        %857 = vadd.xlane.f32.xlu0 %v856
        %v858 = vpop.xlane.xlu0 %857
        %v859 = vsel %vm369, %v821, 0.0
        %860 = vadd.xlane.f32.xlu0 %v859
        %v861 = vpop.xlane.xlu0 %860
        %v862 = vsel %vm369, %v822, 0.0
        %863 = vadd.xlane.f32.xlu0 %v862
        %v864 = vpop.xlane.xlu0 %863
        %v865 = vsel %vm369, %v823, 0.0
        %866 = vadd.xlane.f32.xlu0 %v865
        %v867 = vpop.xlane.xlu0 %866
        %v868 = vsel %vm369, %v824, 0.0
        %869 = vadd.xlane.f32.xlu0 %v868
        %v870 = vpop.xlane.xlu0 %869
        %v871 = vsel %vm369, %v825, 0.0
        %872 = vadd.xlane.f32.xlu0 %v871
        %v873 = vpop.xlane.xlu0 %872
        %874 = vxpose.xlu0.b32.start [1/16] %v764, 128
        %875 = vxpose.xlu0.b32.cont [2/16] %v767, 128
        %876 = vxpose.xlu0.b32.cont [3/16] %v770, 128
        %877 = vxpose.xlu0.b32.cont [4/16] %v773, 128
        %878 = vxpose.xlu0.b32.cont [5/16] %v776, 128
        %879 = vxpose.xlu0.b32.cont [6/16] %v779, 128
        %880 = vxpose.xlu0.b32.cont [7/16] %v782, 128
        %881 = vxpose.xlu0.b32.cont [8/16] %v785, 128
        %882 = vxpose.xlu0.b32.cont [9/16] %v788, 128
        %883 = vxpose.xlu0.b32.cont [10/16] %v791, 128
        %884 = vxpose.xlu0.b32.cont [11/16] %v794, 128
        %885 = vxpose.xlu0.b32.cont [12/16] %v797, 128
        %886 = vxpose.xlu0.b32.cont [13/16] %v800, 128
        %887 = vxpose.xlu0.b32.cont [14/16] %v803, 128
        %888 = vxpose.xlu0.b32.cont [15/16] %v806, 128
        %889 = vxpose.xlu0.b32.end [16/16] %v809, 128
        %v890 = vpop.trf.xlu0
        %v891 = vpop.trf.xlu0
        %v892 = vpop.trf.xlu0
        %v893 = vpop.trf.xlu0
        %v894 = vpop.trf.xlu0
        %v895 = vpop.trf.xlu0
        %v896 = vpop.trf.xlu0
        %v897 = vpop.trf.xlu0
        %v898 = vpop.trf.xlu0
        %v899 = vpop.trf.xlu0
        %v900 = vpop.trf.xlu0
        %v901 = vpop.trf.xlu0
        %v902 = vpop.trf.xlu0
        %v903 = vpop.trf.xlu0
        %v904 = vpop.trf.xlu0
        %v905 = vpop.trf.xlu0
        %906 = vst [vmem:[%s319] sm:$0x1] %v890
        %907 = vxpose.xlu0.b32.start [1/16] %v828, 128
        %908 = vxpose.xlu0.b32.cont [2/16] %v831, 128
        %909 = vxpose.xlu0.b32.cont [3/16] %v834, 128
        %910 = vxpose.xlu0.b32.cont [4/16] %v837, 128
        %911 = vxpose.xlu0.b32.cont [5/16] %v840, 128
        %912 = vxpose.xlu0.b32.cont [6/16] %v843, 128
        %913 = vxpose.xlu0.b32.cont [7/16] %v846, 128
        %914 = vxpose.xlu0.b32.cont [8/16] %v849, 128
        %915 = vxpose.xlu0.b32.cont [9/16] %v852, 128
        %916 = vxpose.xlu0.b32.cont [10/16] %v855, 128
        %917 = vxpose.xlu0.b32.cont [11/16] %v858, 128
        %918 = vxpose.xlu0.b32.cont [12/16] %v861, 128
        %919 = vxpose.xlu0.b32.cont [13/16] %v864, 128
        %920 = vxpose.xlu0.b32.cont [14/16] %v867, 128
        %921 = vxpose.xlu0.b32.cont [15/16] %v870, 128
        %922 = vxpose.xlu0.b32.end [16/16] %v873, 128
        %v923 = vpop.trf.xlu0
        %v924 = vpop.trf.xlu0
        %v925 = vpop.trf.xlu0
        %v926 = vpop.trf.xlu0
        %v927 = vpop.trf.xlu0
        %v928 = vpop.trf.xlu0
        %v929 = vpop.trf.xlu0
        %v930 = vpop.trf.xlu0
        %v931 = vpop.trf.xlu0
        %v932 = vpop.trf.xlu0
        %v933 = vpop.trf.xlu0
        %v934 = vpop.trf.xlu0
        %v935 = vpop.trf.xlu0
        %v936 = vpop.trf.xlu0
        %v937 = vpop.trf.xlu0
        %v938 = vpop.trf.xlu0
        %939 = vst [vmem:[%s319 + $0x1] sm:$0x1] %v923
        %s940 = sand.u32 %s194, 1
        %s941 = scalar_lea.sflag [#allocation3], %s940
        %s942 = sand.u32 %s194, 1
        %s943 = smul.addr %s942, 2
        %s944 = scalar_lea.vmem [#allocation2], %s943
        // Predicated region
        $region45: #{tpu_custom_call.1} parent=43 // pred_check
          %p945 = pneg %p204
        $region46: #{tpu_custom_call.1} parent=43 // pred_check_branch
          %947 = sbr.rel (%p945) target = $region48
        $region47: #{tpu_custom_call.1} parent=43 // pred_region
          %s948 = sadd.s32 %s24, %s25
          %950 = vsyncadd %s941, 0
          %s951 = smul.addr %s948, 2
          %s952 = scalar_lea.hbm %s6, %s951
          %s954 = sshll.u32 %s944, 4
          %s955 = int_to_ptr.vmem [resolvable:$true] %s954
          %s956 = sshll.u32 %s952, 4
          %s957 = int_to_ptr.hbm [resolvable:$true] %s956
          %959 = dma.vmem_to_hbm [thread:$0]  %s955, 32, %s957, %s941
        $region48: #{tpu_custom_call.1} parent=43 // pred_fallthru
          _
      $region44: #{tpu_custom_call.1} parent=5 // pred_fallthru
        _
      %p960 = scmp.le.s32.totalorder 2, %s15
      // Predicated region
      $region49: #{tpu_custom_call.1} parent=5 // pred_check
        %p961 = pneg %p960
      $region50: #{tpu_custom_call.1} parent=5 // pred_check_branch
        %963 = sbr.rel (%p961) target = $region52
      $region51: #{tpu_custom_call.1} parent=5 // pred_region
        %s964 = ssub.s32 %s15, 2
        // Predicated region
        $region53: #{tpu_custom_call.1} parent=51 // pred_check
          %p965 = pneg %p210
        $region54: #{tpu_custom_call.1} parent=51 // pred_check_branch
          %967 = sbr.rel (%p965) target = $region56
        $region55: #{tpu_custom_call.1} parent=51 // pred_region
          %s968 = sand.u32 %s195, 1
          %s969 = scalar_lea.sflag [#allocation3], %s968
          %s970 = sand.u32 %s195, 1
          %s971 = smul.addr %s970, 2
          %s972 = scalar_lea.vmem [#allocation2], %s971
          %974 = dma.done %s969, 32
        $region56: #{tpu_custom_call.1} parent=51 // pred_fallthru
          _
      $region52: #{tpu_custom_call.1} parent=5 // pred_fallthru
        _
    $region6: #{tpu_custom_call.1} parent=1 // loop_footer
      %s19 = sadd.s32 1, %s15
    $region7: #{tpu_custom_call.1} parent=1 // loop_footer_branch
      %14 = sbr.rel target = $region3
    $region8: #{tpu_custom_call.1} parent=1 // loop_exit
      _
    %975 = vsyncpa [#allocation3], 1
    %s976 = scalar_lea.sflag [#allocation3], 1
    %977 = vsyncpa %s976, 1

</llo_original>
